<compile_context>
chip_gen: v7x
topology: tpu7x:2x2x1
jax: 0.10.0
libtpu: 0.0.40
codegen_flags: <defaults>
</compile_context>

<pallas_src>
import jax
import jax.numpy as jnp
from jax import lax
from jax.experimental import pallas as pl
from jax.experimental.pallas import tpu as pltpu
from math import sqrt


def _decoder_kernel(x_ref, w_ref, b_ref, o_ref, acc_ref):
    # x_ref: (nt_tile, bc_tile, HW)   w_ref, b_ref: (1, HW)
    # o_ref: (bc_tile, HW)            acc_ref: (bc_tile, HW) f32 scratch
    k = pl.program_id(1)

    @pl.when(k == 0)
    def _init():
        acc_ref[...] = jnp.zeros_like(acc_ref)

    nt_tile = x_ref.shape[0]
    # Per-slab accumulation (no full (nt_tile, bc_tile, HW) f32 intermediate):
    # live set = one input slab + the accumulator. Unrolled for LLO visibility.
    unroll = nt_tile if nt_tile <= 16 else 8

    def body(t, acc):
        return acc + x_ref[t].astype(jnp.float32)

    acc_ref[...] = lax.fori_loop(0, nt_tile, body, acc_ref[...], unroll=unroll)

    @pl.when(k == pl.num_programs(1) - 1)
    def _finalize():
        # w_ref already contains w / nt (folded in the wrapper).
        o_ref[...] = (acc_ref[...] * w_ref[...] + b_ref[...]).astype(o_ref.dtype)


def _pick_tiles(nt, BC, HW, x_itemsize):
    """Choose (nt_tile, bc_tile) so blocks fit comfortably in scoped VMEM on all chips."""
    # Sublane multiple for the x block's row dim (packed dtypes) and the f32 out block.
    row_mult = max(8, {1: 32, 2: 16}.get(x_itemsize, 8))

    slab_budget = 1 << 20   # f32 bytes of one (bc_tile, HW) row slab (out + acc)
    xblk_budget = 4 << 20   # bytes of one (nt_tile, bc_tile, HW) input block

    divisors = [d for d in range(1, BC + 1) if BC % d == 0]
    valid_rows = [d for d in divisors if d % row_mult == 0] or [BC]  # full-dim fallback

    fitting = [r for r in valid_rows if r * HW * 4 <= slab_budget]
    bc_tile = max(fitting) if fitting else min(valid_rows)

    # v7x: prefer >= 2 row steps (shards across the 2 TensorCores) when each step's
    # input block still carries >= ~1 MiB of data; tiny problems keep a single step.
    if bc_tile == BC:
        smaller = [r for r in fitting if r < BC and nt * r * HW * x_itemsize >= (1 << 20)]
        if smaller:
            bc_tile = max(smaller)

    nt_divs = [d for d in range(1, nt + 1) if nt % d == 0]
    fit_nt = [d for d in nt_divs if d * bc_tile * HW * x_itemsize <= xblk_budget]
    nt_tile = max(fit_nt) if fit_nt else 1

    return nt_tile, bc_tile


def decoder_forward(input_spike, w, b):
    """input_spike: [nt, B, C, H, W] (any dtype; int8/bf16 preferred for spikes)
    w, b: [H, W] float -> out: [B, C, H, W] float32"""
    nt, B, C, H, W = input_spike.shape
    BC, HW = B * C, H * W

    x = input_spike.reshape(nt, BC, HW)
    # Fold the 1/nt firing-rate scale into w on the wrapper side (touches H*W once).
    w2 = (w.astype(jnp.float32) * jnp.float32(1.0 / nt)).reshape(1, HW)
    b2 = b.astype(jnp.float32).reshape(1, HW)

    nt_tile, bc_tile = _pick_tiles(nt, BC, HW, jnp.dtype(x.dtype).itemsize)
    grid = (BC // bc_tile, nt // nt_tile)  # reduction (nt) axis last

    # NOTE: if H*W is not a multiple of 128 the full-extent block is still legal
    # (full-dim exception); only the final store becomes masked, which is cheap
    # relative to the nt-times-larger input stream.

    out = pl.pallas_call(
        _decoder_kernel,
        out_shape=jax.ShapeDtypeStruct((BC, HW), jnp.float32),  # pinned f32 output
        grid_spec=pltpu.PrefetchScalarGridSpec(
            num_scalar_prefetch=0,
            grid=grid,
            in_specs=[
                pl.BlockSpec((nt_tile, bc_tile, HW), lambda i, k: (k, i, 0)),
                pl.BlockSpec((1, HW), lambda i, k: (0, 0)),
                pl.BlockSpec((1, HW), lambda i, k: (0, 0)),
            ],
            out_specs=pl.BlockSpec((bc_tile, HW), lambda i, k: (i, 0)),
            scratch_shapes=[pltpu.VMEM((bc_tile, HW), jnp.float32)],
        ),
        compiler_params=pltpu.CompilerParams(
            dimension_semantics=("parallel", "arbitrary"),
        ),
    )(x, w2, b2)

    return out.reshape(B, C, H, W)


if __name__ == "__main__":
    # Shapes consistent with the module: nt time steps of spikes over
    # [batch, channel, n, n]; decoder params w, b are [n, n].
    nt, batch, channel, n = 8, 2, 4, 16

    key = jax.random.PRNGKey(0)
    k_spike, k_w = jax.random.split(key)

    # Synthetic binary spike train (0/1). Stored as int8 in HBM — the kernel casts
    # to f32 internally; accumulation over 0/1 spikes stays exact.
    input_spike = jax.random.bernoulli(
        k_spike, p=0.3, shape=(nt, batch, channel, n, n)
    ).astype(jnp.int8)

    # Deterministic parameter init mirroring nn.Parameter(torch.normal(mean=0, std=sqrt(2/n)))
    std = sqrt(2.0 / (n + 1e-16))
    w = std * jax.random.normal(k_w, (n, n), dtype=jnp.float32)
    b = jnp.zeros((n, n), dtype=jnp.float32)

    out = decoder_forward(input_spike, w, b)
    out = jax.block_until_ready(out)

    # Pure-JAX reference check (f32 semantics of the PyTorch module).
    ref = (jnp.sum(input_spike.astype(jnp.float32), axis=0) / nt) * w + b
    assert out.shape == (batch, channel, n, n)
    assert out.dtype == jnp.float32
    assert jnp.allclose(out, ref, atol=1e-5, rtol=1e-5), "mismatch vs reference"

    print("KERNEL_OK")
</pallas_src>

<mosaic_0001>
module attributes {stable_mosaic.version = 11 : i64} {
  func.func @_decoder_kernel(%arg0: i32, %arg1: i32, %arg2: memref<8x8x256xi8, #tpu.memory_space<vmem>>, %arg3: memref<1x256xf32, #tpu.memory_space<vmem>>, %arg4: memref<1x256xf32, #tpu.memory_space<vmem>>, %arg5: memref<8x256xf32, #tpu.memory_space<vmem>>, %arg6: memref<8x256xf32, #tpu.memory_space<vmem>>) attributes {dimension_semantics = [#tpu.dimension_semantics<parallel>, #tpu.dimension_semantics<arbitrary>], iteration_bounds = array<i64: 1, 1>, scalar_prefetch = 0 : i64, scratch_operands = 1 : i64, tpu.core_type = #tpu.core_type<tc>, window_params = [{transform_indices = @transform_0, window_bounds = array<i64: 8, 8, 256>}, {pipeline_mode = #tpu.pipeline_mode<synchronous>, transform_indices = @transform_1, window_bounds = array<i64: 1, 256>}, {pipeline_mode = #tpu.pipeline_mode<synchronous>, transform_indices = @transform_2, window_bounds = array<i64: 1, 256>}, {transform_indices = @transform_3, window_bounds = array<i64: 8, 256>}]} {
    %c0_i32 = arith.constant 0 : i32
    %0 = arith.cmpi eq, %arg1, %c0_i32 : i32
    %1 = arith.extui %0 : i1 to i32
    %c0_i32_0 = arith.constant 0 : i32
    %2 = arith.cmpi ne, %1, %c0_i32_0 : i32
    scf.if %2 {
      %cst = arith.constant 0.000000e+00 : f32
      %48 = vector.broadcast %cst : f32 to vector<8x256xf32>
      %c0_23 = arith.constant 0 : index
      %c0_24 = arith.constant 0 : index
      %49 = vector.load %arg6[%c0_23, %c0_24] : memref<8x256xf32, #tpu.memory_space<vmem>>, vector<8x256xf32>
      tpu.vector_store %arg6[%c0_23, %c0_24], %48 {strides = array<i32>} : memref<8x256xf32, #tpu.memory_space<vmem>>, vector<8x256xf32>,
    } else {
    }
    %c0 = arith.constant 0 : index
    %c0_1 = arith.constant 0 : index
    %3 = vector.load %arg6[%c0, %c0_1] : memref<8x256xf32, #tpu.memory_space<vmem>>, vector<8x256xf32>
    %c0_i32_2 = arith.constant 0 : i32
    %4 = arith.index_cast %c0_i32_2 : i32 to index
    %c0_3 = arith.constant 0 : index
    %c0_4 = arith.constant 0 : index
    %5 = vector.load %arg2[%4, %c0_3, %c0_4] : memref<8x8x256xi8, #tpu.memory_space<vmem>>, vector<1x8x256xi8>
    %6 = vector.shape_cast %5 : vector<1x8x256xi8> to vector<8x256xi8>
    %7 = arith.sitofp %6 : vector<8x256xi8> to vector<8x256xf32>
    %8 = arith.addf %3, %7 : vector<8x256xf32>
    %c1_i32 = arith.constant 1 : i32
    %9 = arith.index_cast %c1_i32 : i32 to index
    %c0_5 = arith.constant 0 : index
    %c0_6 = arith.constant 0 : index
    %10 = vector.load %arg2[%9, %c0_5, %c0_6] : memref<8x8x256xi8, #tpu.memory_space<vmem>>, vector<1x8x256xi8>
    %11 = vector.shape_cast %10 : vector<1x8x256xi8> to vector<8x256xi8>
    %12 = arith.sitofp %11 : vector<8x256xi8> to vector<8x256xf32>
    %13 = arith.addf %8, %12 : vector<8x256xf32>
    %c2_i32 = arith.constant 2 : i32
    %14 = arith.index_cast %c2_i32 : i32 to index
    %c0_7 = arith.constant 0 : index
    %c0_8 = arith.constant 0 : index
    %15 = vector.load %arg2[%14, %c0_7, %c0_8] : memref<8x8x256xi8, #tpu.memory_space<vmem>>, vector<1x8x256xi8>
    %16 = vector.shape_cast %15 : vector<1x8x256xi8> to vector<8x256xi8>
    %17 = arith.sitofp %16 : vector<8x256xi8> to vector<8x256xf32>
    %18 = arith.addf %13, %17 : vector<8x256xf32>
    %c3_i32 = arith.constant 3 : i32
    %19 = arith.index_cast %c3_i32 : i32 to index
    %c0_9 = arith.constant 0 : index
    %c0_10 = arith.constant 0 : index
    %20 = vector.load %arg2[%19, %c0_9, %c0_10] : memref<8x8x256xi8, #tpu.memory_space<vmem>>, vector<1x8x256xi8>
    %21 = vector.shape_cast %20 : vector<1x8x256xi8> to vector<8x256xi8>
    %22 = arith.sitofp %21 : vector<8x256xi8> to vector<8x256xf32>
    %23 = arith.addf %18, %22 : vector<8x256xf32>
    %c4_i32 = arith.constant 4 : i32
    %24 = arith.index_cast %c4_i32 : i32 to index
    %c0_11 = arith.constant 0 : index
    %c0_12 = arith.constant 0 : index
    %25 = vector.load %arg2[%24, %c0_11, %c0_12] : memref<8x8x256xi8, #tpu.memory_space<vmem>>, vector<1x8x256xi8>
    %26 = vector.shape_cast %25 : vector<1x8x256xi8> to vector<8x256xi8>
    %27 = arith.sitofp %26 : vector<8x256xi8> to vector<8x256xf32>
    %28 = arith.addf %23, %27 : vector<8x256xf32>
    %c5_i32 = arith.constant 5 : i32
    %29 = arith.index_cast %c5_i32 : i32 to index
    %c0_13 = arith.constant 0 : index
    %c0_14 = arith.constant 0 : index
    %30 = vector.load %arg2[%29, %c0_13, %c0_14] : memref<8x8x256xi8, #tpu.memory_space<vmem>>, vector<1x8x256xi8>
    %31 = vector.shape_cast %30 : vector<1x8x256xi8> to vector<8x256xi8>
    %32 = arith.sitofp %31 : vector<8x256xi8> to vector<8x256xf32>
    %33 = arith.addf %28, %32 : vector<8x256xf32>
    %c6_i32 = arith.constant 6 : i32
    %34 = arith.index_cast %c6_i32 : i32 to index
    %c0_15 = arith.constant 0 : index
    %c0_16 = arith.constant 0 : index
    %35 = vector.load %arg2[%34, %c0_15, %c0_16] : memref<8x8x256xi8, #tpu.memory_space<vmem>>, vector<1x8x256xi8>
    %36 = vector.shape_cast %35 : vector<1x8x256xi8> to vector<8x256xi8>
    %37 = arith.sitofp %36 : vector<8x256xi8> to vector<8x256xf32>
    %38 = arith.addf %33, %37 : vector<8x256xf32>
    %c7_i32 = arith.constant 7 : i32
    %39 = arith.index_cast %c7_i32 : i32 to index
    %c0_17 = arith.constant 0 : index
    %c0_18 = arith.constant 0 : index
    %40 = vector.load %arg2[%39, %c0_17, %c0_18] : memref<8x8x256xi8, #tpu.memory_space<vmem>>, vector<1x8x256xi8>
    %41 = vector.shape_cast %40 : vector<1x8x256xi8> to vector<8x256xi8>
    %42 = arith.sitofp %41 : vector<8x256xi8> to vector<8x256xf32>
    %43 = arith.addf %38, %42 : vector<8x256xf32>
    %c8_i32 = arith.constant 8 : i32
    %c0_19 = arith.constant 0 : index
    %c0_20 = arith.constant 0 : index
    %44 = vector.load %arg6[%c0_19, %c0_20] : memref<8x256xf32, #tpu.memory_space<vmem>>, vector<8x256xf32>
    tpu.vector_store %arg6[%c0_19, %c0_20], %43 {strides = array<i32>} : memref<8x256xf32, #tpu.memory_space<vmem>>, vector<8x256xf32>,
    %c0_i32_21 = arith.constant 0 : i32
    %45 = arith.cmpi eq, %arg1, %c0_i32_21 : i32
    %46 = arith.extui %45 : i1 to i32
    %c0_i32_22 = arith.constant 0 : i32
    %47 = arith.cmpi ne, %46, %c0_i32_22 : i32
    scf.if %47 {
      %c0_23 = arith.constant 0 : index
      %c0_24 = arith.constant 0 : index
      %48 = vector.load %arg6[%c0_23, %c0_24] : memref<8x256xf32, #tpu.memory_space<vmem>>, vector<8x256xf32>
      %c0_25 = arith.constant 0 : index
      %c0_26 = arith.constant 0 : index
      %49 = vector.load %arg3[%c0_25, %c0_26] : memref<1x256xf32, #tpu.memory_space<vmem>>, vector<1x256xf32>
      %50 = vector.broadcast %49 : vector<1x256xf32> to vector<8x256xf32>
      %51 = arith.mulf %48, %50 : vector<8x256xf32>
      %c0_27 = arith.constant 0 : index
      %c0_28 = arith.constant 0 : index
      %52 = vector.load %arg4[%c0_27, %c0_28] : memref<1x256xf32, #tpu.memory_space<vmem>>, vector<1x256xf32>
      %53 = vector.broadcast %52 : vector<1x256xf32> to vector<8x256xf32>
      %54 = arith.addf %51, %53 : vector<8x256xf32>
      %c0_29 = arith.constant 0 : index
      %c0_30 = arith.constant 0 : index
      %55 = vector.load %arg5[%c0_29, %c0_30] : memref<8x256xf32, #tpu.memory_space<vmem>>, vector<8x256xf32>
      tpu.vector_store %arg5[%c0_29, %c0_30], %54 {strides = array<i32>} : memref<8x256xf32, #tpu.memory_space<vmem>>, vector<8x256xf32>,
    } else {
    }
    return
  }
  func.func @transform_0(%arg0: i32, %arg1: i32) -> (i32, i32, i32) {
    %c0_i32 = arith.constant 0 : i32
    %c0_i32_0 = arith.constant 0 : i32
    return %arg1, %arg0, %c0_i32 : i32, i32, i32
  }
  func.func @transform_1(%arg0: i32, %arg1: i32) -> (i32, i32) {
    %c0_i32 = arith.constant 0 : i32
    %c0_i32_0 = arith.constant 0 : i32
    %c0_i32_1 = arith.constant 0 : i32
    return %c0_i32, %c0_i32_0 : i32, i32
  }
  func.func @transform_2(%arg0: i32, %arg1: i32) -> (i32, i32) {
    %c0_i32 = arith.constant 0 : i32
    %c0_i32_0 = arith.constant 0 : i32
    %c0_i32_1 = arith.constant 0 : i32
    return %c0_i32, %c0_i32_0 : i32, i32
  }
  func.func @transform_3(%arg0: i32, %arg1: i32) -> (i32, i32) {
    %c0_i32 = arith.constant 0 : i32
    %c0_i32_0 = arith.constant 0 : i32
    return %arg0, %c0_i32 : i32, i32
  }
}

</mosaic_0001>

<llo_original>
// kernel: tpu_custom_call.1
$region0: #{tpu_custom_call.1}
  #allocation0 [shape = 'u32[]', space=smem, size = 0x4, offset = 0x4, fixed_abs, tag = 'smem constant byte address 0x4 - core index']
  #allocation1 [shape = 'u32[144,128]{1,0:T(1,128)}', space=vmem, size = 0x12000, scoped, tag = 'internal scratch']
  #allocation2 [shape = 'f32[8,256]{1,0:T(8,128)}', space=vmem, size = 0x2000, scoped, tag = 'scratch operand']
  %s0 = inlined_call_operand.hbm [shape: s8[8,8,256], index: 0, kind: input, shape index: {}]
  %s1 = inlined_call_operand.vmem [shape: f32[1,256], index: 1, kind: input, shape index: {}]
  %s2 = inlined_call_operand.vmem [shape: f32[1,256], index: 2, kind: input, shape index: {}]
  %s3 = inlined_call_operand.hbm [shape: f32[8,256], index: 3, kind: output, shape index: {}]
  %s4 = sld [smem:[#allocation0]]
  $region34: #{tpu_custom_call.1} parent=0
    _
  %s6 = ssub.s32 1, %s4
  %s7 = scalar_select 0, %s6, %s4
  $region1: #{tpu_custom_call.1} parent=0
    #allocation3 [shape = 'u8[16384]{0}', space=vmem, size = 0x4000, scoped, tag = 'input window, operand 0, single buffered']
    #allocation4 [shape = 's32[1]{0}', space=sflag, size = 0x4, scoped, tag = 'scoped memory for tpu_custom_call.1']
    #allocation5 [shape = 's32[1]{0}', space=sflag, size = 0x4, scoped, tag = 'scoped memory for tpu_custom_call.1']
    #allocation6 [shape = 'u8[8192]{0}', space=vmem, size = 0x2000, scoped, tag = 'output window, operand 0, single buffered']
    %8 = vsyncpa [#allocation4], 0
    %9 = vsyncpa [#allocation5], 0
    // Predicated region
    $region2: #{tpu_custom_call.1} parent=1 // pred_check
      _
    $region3: #{tpu_custom_call.1} parent=1 // pred_check_branch
      %11 = sbr.rel (0) target = $region5
    $region4: #{tpu_custom_call.1} parent=1 // pred_region
      %s13 = ssub.s32 512, 512
      %14 = vsyncadd [#allocation4], %s13
      %s15 = sshll.u32 [#allocation3], 4
      %s16 = int_to_ptr.vmem [resolvable:$true] %s15
      %21 = dma.hbm_to_vmem [thread:$0]  %s0, 512, %s16, [#allocation4], 64, 64, 4
    $region5: #{tpu_custom_call.1} parent=1 // pred_fallthru
      _
    // Predicated region
    $region6: #{tpu_custom_call.1} parent=1 // pred_check
      _
    $region7: #{tpu_custom_call.1} parent=1 // pred_check_branch
      %23 = sbr.rel (0) target = $region9
    $region8: #{tpu_custom_call.1} parent=1 // pred_region
      _
    $region9: #{tpu_custom_call.1} parent=1 // pred_fallthru
      _
    // Predicated region
    $region10: #{tpu_custom_call.1} parent=1 // pred_check
      _
    $region11: #{tpu_custom_call.1} parent=1 // pred_check_branch
      %25 = sbr.rel (0) target = $region13
    $region12: #{tpu_custom_call.1} parent=1 // pred_region
      _
    $region13: #{tpu_custom_call.1} parent=1 // pred_fallthru
      _
    // Predicated region
    $region14: #{tpu_custom_call.1} parent=1 // pred_check
      _
    $region15: #{tpu_custom_call.1} parent=1 // pred_check_branch
      %27 = sbr.rel (0) target = $region17
    $region16: #{tpu_custom_call.1} parent=1 // pred_region
      %28 = dma.done [#allocation4], 512
    $region17: #{tpu_custom_call.1} parent=1 // pred_fallthru
      _
    %p29 = scmp.eq.s32.totalorder 0, 0
    // Predicated region
    $region18: #{tpu_custom_call.1} parent=1 // pred_check
      %p30 = pneg %p29
    $region19: #{tpu_custom_call.1} parent=1 // pred_check_branch
      %32 = sbr.rel (%p30) target = $region21
    $region20: #{tpu_custom_call.1} parent=1 // pred_region
      %33 = vst [vmem:[#allocation2] sm:$0xff] 0.0
      %34 = vst [vmem:[#allocation2 + $0x8] sm:$0xff] 0.0
    $region21: #{tpu_custom_call.1} parent=1 // pred_fallthru
      _
    %v35 = vld [vmem:[#allocation2] sm:$0xff]
    %v36 = vld [vmem:[#allocation2 + $0x8] sm:$0xff]
    %v37 = vld [vmem:[#allocation3] sm:$0xf]
    %v38 = vunpack.c.0.s8 %v37
    %v39 = vunpack.c.1.s8 %v37
    %v40 = vcvt.s32.f32 %v38
    %v41 = vcvt.s32.f32 %v39
    %v42 = vadd.f32 %v35, %v40
    %v43 = vadd.f32 %v36, %v41
    %s44 = scalar_lea.vmem [#allocation3], 4
    %v45 = vld [vmem:[%s44] sm:$0xf]
    %v46 = vunpack.c.0.s8 %v45
    %v47 = vunpack.c.1.s8 %v45
    %v48 = vcvt.s32.f32 %v46
    %v49 = vcvt.s32.f32 %v47
    %v50 = vadd.f32 %v42, %v48
    %v51 = vadd.f32 %v43, %v49
    %s52 = scalar_lea.vmem [#allocation3], 8
    %v53 = vld [vmem:[%s52] sm:$0xf]
    %v54 = vunpack.c.0.s8 %v53
    %v55 = vunpack.c.1.s8 %v53
    %v56 = vcvt.s32.f32 %v54
    %v57 = vcvt.s32.f32 %v55
    %v58 = vadd.f32 %v50, %v56
    %v59 = vadd.f32 %v51, %v57
    %s60 = scalar_lea.vmem [#allocation3], 12
    %v61 = vld [vmem:[%s60] sm:$0xf]
    %v62 = vunpack.c.0.s8 %v61
    %v63 = vunpack.c.1.s8 %v61
    %v64 = vcvt.s32.f32 %v62
    %v65 = vcvt.s32.f32 %v63
    %v66 = vadd.f32 %v58, %v64
    %v67 = vadd.f32 %v59, %v65
    %s68 = scalar_lea.vmem [#allocation3], 16
    %v69 = vld [vmem:[%s68] sm:$0xf]
    %v70 = vunpack.c.0.s8 %v69
    %v71 = vunpack.c.1.s8 %v69
    %v72 = vcvt.s32.f32 %v70
    %v73 = vcvt.s32.f32 %v71
    %v74 = vadd.f32 %v66, %v72
    %v75 = vadd.f32 %v67, %v73
    %s76 = scalar_lea.vmem [#allocation3], 20
    %v77 = vld [vmem:[%s76] sm:$0xf]
    %v78 = vunpack.c.0.s8 %v77
    %v79 = vunpack.c.1.s8 %v77
    %v80 = vcvt.s32.f32 %v78
    %v81 = vcvt.s32.f32 %v79
    %v82 = vadd.f32 %v74, %v80
    %v83 = vadd.f32 %v75, %v81
    %s84 = scalar_lea.vmem [#allocation3], 24
    %v85 = vld [vmem:[%s84] sm:$0xf]
    %v86 = vunpack.c.0.s8 %v85
    %v87 = vunpack.c.1.s8 %v85
    %v88 = vcvt.s32.f32 %v86
    %v89 = vcvt.s32.f32 %v87
    %v90 = vadd.f32 %v82, %v88
    %v91 = vadd.f32 %v83, %v89
    %s92 = scalar_lea.vmem [#allocation3], 28
    %v93 = vld [vmem:[%s92] sm:$0xf]
    %v94 = vunpack.c.0.s8 %v93
    %v95 = vunpack.c.1.s8 %v93
    %v96 = vcvt.s32.f32 %v94
    %v97 = vcvt.s32.f32 %v95
    %v98 = vadd.f32 %v90, %v96
    %v99 = vadd.f32 %v91, %v97
    %100 = vst [vmem:[#allocation2] sm:$0xff] %v98
    %101 = vst [vmem:[#allocation2 + $0x8] sm:$0xff] %v99
    // Predicated region
    $region22: #{tpu_custom_call.1} parent=1 // pred_check
      %p102 = pneg %p29
    $region23: #{tpu_custom_call.1} parent=1 // pred_check_branch
      %104 = sbr.rel (%p102) target = $region25
    $region24: #{tpu_custom_call.1} parent=1 // pred_region
      %v105 = vld [vmem:[#allocation2] sm:$0xff]
      %v106 = vld [vmem:[#allocation2 + $0x8] sm:$0xff]
      %v107 = vld [vmem:[%s1] sm:$0x3]
      %v109 = vlaneseq
      %v110 = vshrl.u32 %v109, 7
      %v111 = vsub.s32 0, %v110
      %v112 = vrot.slane %v107, %v111
      %v113 = vlaneseq
      %v114 = vshrl.u32 %v113, 7
      %v115 = vsub.s32 1, %v114
      %v116 = vrot.slane %v107, %v115
      %v119 = vmul.f32 %v105, %v112
      %v120 = vmul.f32 %v106, %v116
      %v121 = vld [vmem:[%s2] sm:$0x3]
      %v123 = vlaneseq
      %v124 = vshrl.u32 %v123, 7
      %v125 = vsub.s32 0, %v124
      %v126 = vrot.slane %v121, %v125
      %v127 = vlaneseq
      %v128 = vshrl.u32 %v127, 7
      %v129 = vsub.s32 1, %v128
      %v130 = vrot.slane %v121, %v129
      %v133 = vadd.f32 %v119, %v126
      %v134 = vadd.f32 %v120, %v130
      %135 = vst [vmem:[#allocation6] sm:$0xff] %v133
      %136 = vst [vmem:[#allocation6 + $0x8] sm:$0xff] %v134
    $region25: #{tpu_custom_call.1} parent=1 // pred_fallthru
      _
    // Predicated region
    $region26: #{tpu_custom_call.1} parent=1 // pred_check
      _
    $region27: #{tpu_custom_call.1} parent=1 // pred_check_branch
      %138 = sbr.rel (0) target = $region29
    $region28: #{tpu_custom_call.1} parent=1 // pred_region
      %s140 = ssub.s32 256, 256
      %141 = vsyncadd [#allocation5], %s140
      %s143 = sshll.u32 [#allocation6], 4
      %s144 = int_to_ptr.vmem [resolvable:$true] %s143
      %146 = dma.vmem_to_hbm [thread:$0]  %s144, 256, %s3, [#allocation5]
    $region29: #{tpu_custom_call.1} parent=1 // pred_fallthru
      _
    // Predicated region
    $region30: #{tpu_custom_call.1} parent=1 // pred_check
      _
    $region31: #{tpu_custom_call.1} parent=1 // pred_check_branch
      %148 = sbr.rel (0) target = $region33
    $region32: #{tpu_custom_call.1} parent=1 // pred_region
      %149 = dma.done [#allocation5], 256
    $region33: #{tpu_custom_call.1} parent=1 // pred_fallthru
      _
    %150 = vsyncpa [#allocation4], 1
    %151 = vsyncpa [#allocation5], 1

</llo_original>
